<compile_context>
chip_gen: v7x
topology: tpu7x:2x2x1
jax: 0.10.0
libtpu: 0.0.40
codegen_flags: <defaults>
</compile_context>

<pallas_src>
import functools

import jax
import jax.numpy as jnp
from jax.experimental import pallas as pl
from jax.experimental.pallas import tpu as pltpu


_MASK_VALUE = -0.7 * float(jnp.finfo(jnp.float32).max)   # finite "-inf"


def _mha_fused_kernel(x_ref, wqkv_ref, bqkv_ref, wp_ref, bp_ref, out_ref,
                      attn_ref, *, num_heads, head_size):
    """One batch element: fused QKV + causal attention (all heads) + out proj."""
    x = x_ref[0]                                    # (C, E) bf16
    C = x.shape[0]
    E = num_heads * head_size

    # Fused Q/K/V projection for all heads: (C, E) @ (E, 3E) -> (C, 3E), f32 acc.
    # Single K=E matmul instead of 3*num_heads narrow ones; Q scale pre-folded.
    qkv = jnp.dot(x, wqkv_ref[...], preferred_element_type=jnp.float32)
    qkv = qkv + bqkv_ref[...]                       # f32 bias broadcast over rows

    # Causal mask, shared across heads.  Finite fill value: a fully-masked row
    # (e.g. padding) softmaxes to zeros instead of NaN.
    row = jax.lax.broadcasted_iota(jnp.int32, (C, C), 0)
    col = jax.lax.broadcasted_iota(jnp.int32, (C, C), 1)
    causal = col <= row

    # Static unroll over heads (num_heads is small at these shapes).
    # TODO(synk): for production head counts (>~8-16) / production E, move the
    # heads to a sublane-major layout or a lax.fori_loop / grid axis so the
    # per-head lane slices of qkv stop being cross-lane extracts and the
    # unrolled body's vreg live ranges stay bounded.
    for h in range(num_heads):
        q = qkv[:, h * head_size:(h + 1) * head_size]
        k = qkv[:, E + h * head_size:E + (h + 1) * head_size]
        v = qkv[:, 2 * E + h * head_size:2 * E + (h + 1) * head_size]

        # q @ k^T without materializing the transpose (contract dim 1 with 1).
        s = jax.lax.dot_general(
            q.astype(jnp.bfloat16), k.astype(jnp.bfloat16),
            dimension_numbers=(((1,), (1,)), ((), ())),
            preferred_element_type=jnp.float32)                  # (C, C)
        s = jnp.where(causal, s, _MASK_VALUE)

        # Softmax in f32; normalize via approximate reciprocal (EUP slot).
        # TODO(synk): for production sequence lengths, tile queries ("parallel"
        # grid axis) and KV ("arbitrary" last axis) with an online-softmax
        # (flash) m/l/acc scratch so the (C, C) score block stays within the
        # v7x 64 MiB VMEM budget and each TensorCore gets >=4-8 pipelined grid
        # steps; full-C blocks (and grid=(B,)) are fine at these tiny shapes.
        s = s - jnp.max(s, axis=-1, keepdims=True)
        p = jnp.exp(s)
        p = p * pl.reciprocal(jnp.sum(p, axis=-1, keepdims=True), approx=True)

        head_out = jnp.dot(p.astype(jnp.bfloat16), v.astype(jnp.bfloat16),
                           preferred_element_type=jnp.float32)   # (C, hs)

        # Lane-concatenate this head's output into VMEM scratch; the output
        # projection then runs once instead of num_heads K=head_size matmuls.
        attn_ref[:, h * head_size:(h + 1) * head_size] = head_out

    # Single (C, E) @ (E, E) output projection: K=E fills the MXU systolic
    # depth and (on v7x) accumulates in the MRB instead of per-head VPU adds.
    out_ref[0] = (jnp.dot(attn_ref[...].astype(jnp.bfloat16), wp_ref[...],
                          preferred_element_type=jnp.float32) + bp_ref[...])


def pack_mha_params(params, *, num_heads, head_size):
    """Repack the per-head PyTorch-layout parameters for the fused kernel.

    Call this ONCE at parameter setup / load time (not per forward): all the
    transposes, concatenations, the 1/sqrt(head_size) scale fold and the bf16
    casts happen here, so the forward path is just the single pallas_call.
    """
    E = num_heads * head_size
    scale = jnp.float32(head_size) ** -0.5

    def heads_to_cols(w):            # (num_heads, E, hs) -> (E, num_heads*hs)
        return w.transpose(1, 0, 2).reshape(E, E)

    def bias_to_row(b):              # (num_heads, 1, hs) -> (1, num_heads*hs)
        return b.transpose(1, 0, 2).reshape(1, E)

    w_qkv = jnp.concatenate(
        [heads_to_cols(params["wq"]) * scale,      # fold scale into Q weights
         heads_to_cols(params["wk"]),
         heads_to_cols(params["wv"])], axis=-1).astype(jnp.bfloat16)   # (E, 3E)
    b_qkv = jnp.concatenate(
        [bias_to_row(params["bq"]) * scale,        # fold scale into Q bias
         bias_to_row(params["bk"]),
         bias_to_row(params["bv"])], axis=-1).astype(jnp.float32)      # (1, 3E)

    return {
        "w_qkv": w_qkv,
        "b_qkv": b_qkv,
        "wp": params["wp"].astype(jnp.bfloat16),   # (E, E)
        "bp": params["bp"].astype(jnp.float32),    # (1, E)
    }


def multi_head_attention(x, packed, *, num_heads, head_size):
    """Forward pass. `packed` comes from pack_mha_params (setup-time repack)."""
    B, C, E = x.shape
    assert E == num_heads * head_size

    w_qkv, b_qkv = packed["w_qkv"], packed["b_qkv"]
    wp, bp = packed["wp"], packed["bp"]
    x_bf16 = x.astype(jnp.bfloat16)

    kernel = functools.partial(_mha_fused_kernel,
                               num_heads=num_heads, head_size=head_size)

    flops = (2 * B * C * E * 3 * E                       # fused QKV projection
             + 4 * B * num_heads * C * C * head_size     # scores + p @ v
             + 2 * B * C * E * E)                        # output projection
    cost = pl.CostEstimate(
        flops=flops,
        transcendentals=B * num_heads * C * C,
        bytes_accessed=(x_bf16.size * 2 + w_qkv.size * 2 + wp.size * 2
                        + b_qkv.size * 4 + bp.size * 4 + B * C * E * 4))

    # TODO(synk): at production E, put pipeline_mode=pl.Buffered(1) on the
    # constant-index weight BlockSpecs (w_qkv / wp) so v7x's 64 MiB VMEM is not
    # spent double-buffering blocks whose index never changes; at production E
    # (multiple of 128) the output store below is also lane-dense.
    return pl.pallas_call(
        kernel,
        out_shape=jax.ShapeDtypeStruct((B, C, E), jnp.float32),
        grid_spec=pltpu.PrefetchScalarGridSpec(
            num_scalar_prefetch=0,
            grid=(B,),
            in_specs=[
                pl.BlockSpec((1, C, E), lambda b: (b, 0, 0)),        # x
                pl.BlockSpec((E, 3 * E), lambda b: (0, 0)),          # fused Wqkv
                pl.BlockSpec((1, 3 * E), lambda b: (0, 0)),          # fused bqkv
                pl.BlockSpec((E, E), lambda b: (0, 0)),              # Wp
                pl.BlockSpec((1, E), lambda b: (0, 0)),              # bp
            ],
            out_specs=pl.BlockSpec((1, C, E), lambda b: (b, 0, 0)),
            scratch_shapes=[pltpu.VMEM((C, E), jnp.float32)],        # head concat
        ),
        compiler_params=pltpu.CompilerParams(
            # B=2 parallel grid splits across v7x's two TensorCores; no-op on
            # single-TC v5e/v6e.  Explicit scoped-VMEM limit (headroom on all
            # of v5e/v6e/v7x at these shapes).
            dimension_semantics=("parallel",),
            vmem_limit_bytes=32 * 1024 * 1024),
        cost_estimate=cost,
    )(x_bf16, w_qkv, b_qkv, wp, bp)


def _reference(x, params, *, num_heads, head_size):
    """Plain-JAX (f32) re-implementation of the PyTorch forward for validation."""
    B, C, E = x.shape
    outs = []
    for h in range(num_heads):
        q = x @ params["wq"][h] + params["bq"][h]
        k = x @ params["wk"][h] + params["bk"][h]
        v = x @ params["wv"][h] + params["bv"][h]
        s = (q @ k.transpose(0, 2, 1)) * (head_size ** -0.5)
        mask = jnp.tril(jnp.ones((C, C)))
        s = jnp.where(mask == 0, -jnp.inf, s)
        w = jax.nn.softmax(s, axis=-1)
        outs.append(w @ v)
    concat = jnp.concatenate(outs, axis=-1)
    return concat @ params["wp"] + params["bp"]


if __name__ == "__main__":
    # Small shapes consistent with the module.
    B = 2
    num_heads = 4
    head_size = 8
    context_length = 8
    C = context_length
    E = num_heads * head_size          # 32

    key = jax.random.PRNGKey(0)
    ks = jax.random.split(key, 9)

    params = {
        "wq": 0.1 * jax.random.normal(ks[0], (num_heads, E, head_size), jnp.float32),
        "bq": 0.1 * jax.random.normal(ks[1], (num_heads, 1, head_size), jnp.float32),
        "wk": 0.1 * jax.random.normal(ks[2], (num_heads, E, head_size), jnp.float32),
        "bk": 0.1 * jax.random.normal(ks[3], (num_heads, 1, head_size), jnp.float32),
        "wv": 0.1 * jax.random.normal(ks[4], (num_heads, E, head_size), jnp.float32),
        "bv": 0.1 * jax.random.normal(ks[5], (num_heads, 1, head_size), jnp.float32),
        "wp": 0.1 * jax.random.normal(ks[6], (E, E), jnp.float32),
        "bp": 0.1 * jax.random.normal(ks[7], (1, E), jnp.float32),
    }

    x = jax.random.normal(ks[8], (B, C, E), jnp.float32)

    # One-time, setup-cost weight repack (hoisted off the forward path).
    packed = jax.block_until_ready(
        pack_mha_params(params, num_heads=num_heads, head_size=head_size))

    out = multi_head_attention(x, packed, num_heads=num_heads, head_size=head_size)
    out = jax.block_until_ready(out)

    ref = _reference(x, params, num_heads=num_heads, head_size=head_size)
    assert out.shape == (B, C, E)
    # Matmul operands are bf16 (f32 accumulate), so compare with a bf16-level tolerance.
    assert jnp.allclose(out, ref, atol=2e-2, rtol=2e-2), "mismatch vs reference"

    print("KERNEL_OK")
</pallas_src>

<mosaic_0001>
module attributes {stable_mosaic.version = 11 : i64} {
  func.func @_mha_fused_kernel(%arg0: i32, %arg1: memref<1x8x32xbf16, #tpu.memory_space<vmem>>, %arg2: memref<32x96xbf16, #tpu.memory_space<vmem>>, %arg3: memref<1x96xf32, #tpu.memory_space<vmem>>, %arg4: memref<32x32xbf16, #tpu.memory_space<vmem>>, %arg5: memref<1x32xf32, #tpu.memory_space<vmem>>, %arg6: memref<1x8x32xf32, #tpu.memory_space<vmem>>, %arg7: memref<8x32xf32, #tpu.memory_space<vmem>>) attributes {dimension_semantics = [#tpu.dimension_semantics<parallel>], iteration_bounds = array<i64: 2>, scalar_prefetch = 0 : i64, scratch_operands = 1 : i64, tpu.core_type = #tpu.core_type<tc>, window_params = [{transform_indices = @transform_0, window_bounds = array<i64: 1, 8, 32>}, {pipeline_mode = #tpu.pipeline_mode<synchronous>, transform_indices = @transform_1, window_bounds = array<i64: 32, 96>}, {pipeline_mode = #tpu.pipeline_mode<synchronous>, transform_indices = @transform_2, window_bounds = array<i64: 1, 96>}, {pipeline_mode = #tpu.pipeline_mode<synchronous>, transform_indices = @transform_3, window_bounds = array<i64: 32, 32>}, {pipeline_mode = #tpu.pipeline_mode<synchronous>, transform_indices = @transform_4, window_bounds = array<i64: 1, 32>}, {transform_indices = @transform_5, window_bounds = array<i64: 1, 8, 32>}]} {
    %c0 = arith.constant 0 : index
    %c0_0 = arith.constant 0 : index
    %c0_1 = arith.constant 0 : index
    %0 = vector.load %arg1[%c0, %c0_0, %c0_1] : memref<1x8x32xbf16, #tpu.memory_space<vmem>>, vector<1x8x32xbf16>
    %1 = vector.shape_cast %0 : vector<1x8x32xbf16> to vector<8x32xbf16>
    %c0_2 = arith.constant 0 : index
    %c0_3 = arith.constant 0 : index
    %2 = vector.load %arg2[%c0_2, %c0_3] : memref<32x96xbf16, #tpu.memory_space<vmem>>, vector<32x96xbf16>
    %cst = arith.constant dense<0.000000e+00> : vector<8x96xf32>
    %3 = tpu.matmul %1, %2, %cst {dimension_numbers = #tpu.dot_dimension_numbers<[1], [0], [0], [1], [0, 0, 1, 1], [], []>} : vector<8x32xbf16>, vector<32x96xbf16>, vector<8x96xf32> -> vector<8x96xf32>
    %c0_4 = arith.constant 0 : index
    %c0_5 = arith.constant 0 : index
    %4 = vector.load %arg3[%c0_4, %c0_5] : memref<1x96xf32, #tpu.memory_space<vmem>>, vector<1x96xf32>
    %5 = vector.broadcast %4 : vector<1x96xf32> to vector<8x96xf32>
    %6 = arith.addf %3, %5 : vector<8x96xf32>
    %7 = tpu.iota {dimensions = array<i32: 0>} : vector<8x8xi32>
    %8 = tpu.iota {dimensions = array<i32: 1>} : vector<8x8xi32>
    %9 = arith.cmpi sle, %8, %7 : vector<8x8xi32>
    %10 = vector.extract_strided_slice %6 {offsets = [0, 0], sizes = [8, 8], strides = [1, 1]} : vector<8x96xf32> to vector<8x8xf32>
    %11 = vector.extract_strided_slice %6 {offsets = [0, 32], sizes = [8, 8], strides = [1, 1]} : vector<8x96xf32> to vector<8x8xf32>
    %12 = vector.extract_strided_slice %6 {offsets = [0, 64], sizes = [8, 8], strides = [1, 1]} : vector<8x96xf32> to vector<8x8xf32>
    %13 = arith.truncf %10 : vector<8x8xf32> to vector<8x8xbf16>
    %14 = arith.truncf %11 : vector<8x8xf32> to vector<8x8xbf16>
    %cst_6 = arith.constant dense<0.000000e+00> : vector<8x8xf32>
    %15 = tpu.matmul %13, %14, %cst_6 {dimension_numbers = #tpu.dot_dimension_numbers<[1], [1], [0], [0], [0, 0, 1, 0], [], []>} : vector<8x8xbf16>, vector<8x8xbf16>, vector<8x8xf32> -> vector<8x8xf32>
    %cst_7 = arith.constant -2.38197633E+38 : f32
    %16 = vector.broadcast %cst_7 : f32 to vector<8x8xf32>
    %17 = arith.select %9, %15, %16 : vector<8x8xi1>, vector<8x8xf32>
    %cst_8 = arith.constant dense<0xFF800000> : vector<8xf32>
    %18 = vector.multi_reduction <maximumf>, %17, %cst_8 [1] : vector<8x8xf32> to vector<8xf32>
    %19 = vector.shape_cast %18 : vector<8xf32> to vector<8x1xf32>
    %20 = vector.broadcast %19 : vector<8x1xf32> to vector<8x8xf32>
    %21 = arith.subf %17, %20 : vector<8x8xf32>
    %22 = math.exp %21 : vector<8x8xf32>
    %cst_9 = arith.constant dense<0.000000e+00> : vector<8xf32>
    %23 = vector.multi_reduction <add>, %22, %cst_9 [1] : vector<8x8xf32> to vector<8xf32>
    %24 = vector.shape_cast %23 : vector<8xf32> to vector<8x1xf32>
    %25 = tpu.reciprocal %24 {approx = true} : vector<8x1xf32> -> vector<8x1xf32>
    %26 = vector.broadcast %25 : vector<8x1xf32> to vector<8x8xf32>
    %27 = arith.mulf %22, %26 : vector<8x8xf32>
    %28 = arith.truncf %27 : vector<8x8xf32> to vector<8x8xbf16>
    %29 = arith.truncf %12 : vector<8x8xf32> to vector<8x8xbf16>
    %cst_10 = arith.constant dense<0.000000e+00> : vector<8x8xf32>
    %30 = tpu.matmul %28, %29, %cst_10 {dimension_numbers = #tpu.dot_dimension_numbers<[1], [0], [0], [1], [0, 0, 1, 1], [], []>} : vector<8x8xbf16>, vector<8x8xbf16>, vector<8x8xf32> -> vector<8x8xf32>
    %c0_11 = arith.constant 0 : index
    %c0_12 = arith.constant 0 : index
    %31 = vector.load %arg7[%c0_11, %c0_12] : memref<8x32xf32, #tpu.memory_space<vmem>>, vector<8x8xf32>
    tpu.vector_store %arg7[%c0_11, %c0_12], %30 {strides = array<i32>} : memref<8x32xf32, #tpu.memory_space<vmem>>, vector<8x8xf32>,
    %32 = vector.extract_strided_slice %6 {offsets = [0, 8], sizes = [8, 8], strides = [1, 1]} : vector<8x96xf32> to vector<8x8xf32>
    %33 = vector.extract_strided_slice %6 {offsets = [0, 40], sizes = [8, 8], strides = [1, 1]} : vector<8x96xf32> to vector<8x8xf32>
    %34 = vector.extract_strided_slice %6 {offsets = [0, 72], sizes = [8, 8], strides = [1, 1]} : vector<8x96xf32> to vector<8x8xf32>
    %35 = arith.truncf %32 : vector<8x8xf32> to vector<8x8xbf16>
    %36 = arith.truncf %33 : vector<8x8xf32> to vector<8x8xbf16>
    %cst_13 = arith.constant dense<0.000000e+00> : vector<8x8xf32>
    %37 = tpu.matmul %35, %36, %cst_13 {dimension_numbers = #tpu.dot_dimension_numbers<[1], [1], [0], [0], [0, 0, 1, 0], [], []>} : vector<8x8xbf16>, vector<8x8xbf16>, vector<8x8xf32> -> vector<8x8xf32>
    %cst_14 = arith.constant -2.38197633E+38 : f32
    %38 = vector.broadcast %cst_14 : f32 to vector<8x8xf32>
    %39 = arith.select %9, %37, %38 : vector<8x8xi1>, vector<8x8xf32>
    %cst_15 = arith.constant dense<0xFF800000> : vector<8xf32>
    %40 = vector.multi_reduction <maximumf>, %39, %cst_15 [1] : vector<8x8xf32> to vector<8xf32>
    %41 = vector.shape_cast %40 : vector<8xf32> to vector<8x1xf32>
    %42 = vector.broadcast %41 : vector<8x1xf32> to vector<8x8xf32>
    %43 = arith.subf %39, %42 : vector<8x8xf32>
    %44 = math.exp %43 : vector<8x8xf32>
    %cst_16 = arith.constant dense<0.000000e+00> : vector<8xf32>
    %45 = vector.multi_reduction <add>, %44, %cst_16 [1] : vector<8x8xf32> to vector<8xf32>
    %46 = vector.shape_cast %45 : vector<8xf32> to vector<8x1xf32>
    %47 = tpu.reciprocal %46 {approx = true} : vector<8x1xf32> -> vector<8x1xf32>
    %48 = vector.broadcast %47 : vector<8x1xf32> to vector<8x8xf32>
    %49 = arith.mulf %44, %48 : vector<8x8xf32>
    %50 = arith.truncf %49 : vector<8x8xf32> to vector<8x8xbf16>
    %51 = arith.truncf %34 : vector<8x8xf32> to vector<8x8xbf16>
    %cst_17 = arith.constant dense<0.000000e+00> : vector<8x8xf32>
    %52 = tpu.matmul %50, %51, %cst_17 {dimension_numbers = #tpu.dot_dimension_numbers<[1], [0], [0], [1], [0, 0, 1, 1], [], []>} : vector<8x8xbf16>, vector<8x8xbf16>, vector<8x8xf32> -> vector<8x8xf32>
    %c0_18 = arith.constant 0 : index
    %c8 = arith.constant 8 : index
    %53 = vector.load %arg7[%c0_18, %c8] : memref<8x32xf32, #tpu.memory_space<vmem>>, vector<8x8xf32>
    tpu.vector_store %arg7[%c0_18, %c8], %52 {strides = array<i32>} : memref<8x32xf32, #tpu.memory_space<vmem>>, vector<8x8xf32>,
    %54 = vector.extract_strided_slice %6 {offsets = [0, 16], sizes = [8, 8], strides = [1, 1]} : vector<8x96xf32> to vector<8x8xf32>
    %55 = vector.extract_strided_slice %6 {offsets = [0, 48], sizes = [8, 8], strides = [1, 1]} : vector<8x96xf32> to vector<8x8xf32>
    %56 = vector.extract_strided_slice %6 {offsets = [0, 80], sizes = [8, 8], strides = [1, 1]} : vector<8x96xf32> to vector<8x8xf32>
    %57 = arith.truncf %54 : vector<8x8xf32> to vector<8x8xbf16>
    %58 = arith.truncf %55 : vector<8x8xf32> to vector<8x8xbf16>
    %cst_19 = arith.constant dense<0.000000e+00> : vector<8x8xf32>
    %59 = tpu.matmul %57, %58, %cst_19 {dimension_numbers = #tpu.dot_dimension_numbers<[1], [1], [0], [0], [0, 0, 1, 0], [], []>} : vector<8x8xbf16>, vector<8x8xbf16>, vector<8x8xf32> -> vector<8x8xf32>
    %cst_20 = arith.constant -2.38197633E+38 : f32
    %60 = vector.broadcast %cst_20 : f32 to vector<8x8xf32>
    %61 = arith.select %9, %59, %60 : vector<8x8xi1>, vector<8x8xf32>
    %cst_21 = arith.constant dense<0xFF800000> : vector<8xf32>
    %62 = vector.multi_reduction <maximumf>, %61, %cst_21 [1] : vector<8x8xf32> to vector<8xf32>
    %63 = vector.shape_cast %62 : vector<8xf32> to vector<8x1xf32>
    %64 = vector.broadcast %63 : vector<8x1xf32> to vector<8x8xf32>
    %65 = arith.subf %61, %64 : vector<8x8xf32>
    %66 = math.exp %65 : vector<8x8xf32>
    %cst_22 = arith.constant dense<0.000000e+00> : vector<8xf32>
    %67 = vector.multi_reduction <add>, %66, %cst_22 [1] : vector<8x8xf32> to vector<8xf32>
    %68 = vector.shape_cast %67 : vector<8xf32> to vector<8x1xf32>
    %69 = tpu.reciprocal %68 {approx = true} : vector<8x1xf32> -> vector<8x1xf32>
    %70 = vector.broadcast %69 : vector<8x1xf32> to vector<8x8xf32>
    %71 = arith.mulf %66, %70 : vector<8x8xf32>
    %72 = arith.truncf %71 : vector<8x8xf32> to vector<8x8xbf16>
    %73 = arith.truncf %56 : vector<8x8xf32> to vector<8x8xbf16>
    %cst_23 = arith.constant dense<0.000000e+00> : vector<8x8xf32>
    %74 = tpu.matmul %72, %73, %cst_23 {dimension_numbers = #tpu.dot_dimension_numbers<[1], [0], [0], [1], [0, 0, 1, 1], [], []>} : vector<8x8xbf16>, vector<8x8xbf16>, vector<8x8xf32> -> vector<8x8xf32>
    %c0_24 = arith.constant 0 : index
    %c16 = arith.constant 16 : index
    %75 = vector.load %arg7[%c0_24, %c16] : memref<8x32xf32, #tpu.memory_space<vmem>>, vector<8x8xf32>
    tpu.vector_store %arg7[%c0_24, %c16], %74 {strides = array<i32>} : memref<8x32xf32, #tpu.memory_space<vmem>>, vector<8x8xf32>,
    %76 = vector.extract_strided_slice %6 {offsets = [0, 24], sizes = [8, 8], strides = [1, 1]} : vector<8x96xf32> to vector<8x8xf32>
    %77 = vector.extract_strided_slice %6 {offsets = [0, 56], sizes = [8, 8], strides = [1, 1]} : vector<8x96xf32> to vector<8x8xf32>
    %78 = vector.extract_strided_slice %6 {offsets = [0, 88], sizes = [8, 8], strides = [1, 1]} : vector<8x96xf32> to vector<8x8xf32>
    %79 = arith.truncf %76 : vector<8x8xf32> to vector<8x8xbf16>
    %80 = arith.truncf %77 : vector<8x8xf32> to vector<8x8xbf16>
    %cst_25 = arith.constant dense<0.000000e+00> : vector<8x8xf32>
    %81 = tpu.matmul %79, %80, %cst_25 {dimension_numbers = #tpu.dot_dimension_numbers<[1], [1], [0], [0], [0, 0, 1, 0], [], []>} : vector<8x8xbf16>, vector<8x8xbf16>, vector<8x8xf32> -> vector<8x8xf32>
    %cst_26 = arith.constant -2.38197633E+38 : f32
    %82 = vector.broadcast %cst_26 : f32 to vector<8x8xf32>
    %83 = arith.select %9, %81, %82 : vector<8x8xi1>, vector<8x8xf32>
    %cst_27 = arith.constant dense<0xFF800000> : vector<8xf32>
    %84 = vector.multi_reduction <maximumf>, %83, %cst_27 [1] : vector<8x8xf32> to vector<8xf32>
    %85 = vector.shape_cast %84 : vector<8xf32> to vector<8x1xf32>
    %86 = vector.broadcast %85 : vector<8x1xf32> to vector<8x8xf32>
    %87 = arith.subf %83, %86 : vector<8x8xf32>
    %88 = math.exp %87 : vector<8x8xf32>
    %cst_28 = arith.constant dense<0.000000e+00> : vector<8xf32>
    %89 = vector.multi_reduction <add>, %88, %cst_28 [1] : vector<8x8xf32> to vector<8xf32>
    %90 = vector.shape_cast %89 : vector<8xf32> to vector<8x1xf32>
    %91 = tpu.reciprocal %90 {approx = true} : vector<8x1xf32> -> vector<8x1xf32>
    %92 = vector.broadcast %91 : vector<8x1xf32> to vector<8x8xf32>
    %93 = arith.mulf %88, %92 : vector<8x8xf32>
    %94 = arith.truncf %93 : vector<8x8xf32> to vector<8x8xbf16>
    %95 = arith.truncf %78 : vector<8x8xf32> to vector<8x8xbf16>
    %cst_29 = arith.constant dense<0.000000e+00> : vector<8x8xf32>
    %96 = tpu.matmul %94, %95, %cst_29 {dimension_numbers = #tpu.dot_dimension_numbers<[1], [0], [0], [1], [0, 0, 1, 1], [], []>} : vector<8x8xbf16>, vector<8x8xbf16>, vector<8x8xf32> -> vector<8x8xf32>
    %c0_30 = arith.constant 0 : index
    %c24 = arith.constant 24 : index
    %97 = vector.load %arg7[%c0_30, %c24] : memref<8x32xf32, #tpu.memory_space<vmem>>, vector<8x8xf32>
    tpu.vector_store %arg7[%c0_30, %c24], %96 {strides = array<i32>} : memref<8x32xf32, #tpu.memory_space<vmem>>, vector<8x8xf32>,
    %c0_31 = arith.constant 0 : index
    %c0_32 = arith.constant 0 : index
    %98 = vector.load %arg7[%c0_31, %c0_32] : memref<8x32xf32, #tpu.memory_space<vmem>>, vector<8x32xf32>
    %99 = arith.truncf %98 : vector<8x32xf32> to vector<8x32xbf16>
    %c0_33 = arith.constant 0 : index
    %c0_34 = arith.constant 0 : index
    %100 = vector.load %arg4[%c0_33, %c0_34] : memref<32x32xbf16, #tpu.memory_space<vmem>>, vector<32x32xbf16>
    %cst_35 = arith.constant dense<0.000000e+00> : vector<8x32xf32>
    %101 = tpu.matmul %99, %100, %cst_35 {dimension_numbers = #tpu.dot_dimension_numbers<[1], [0], [0], [1], [0, 0, 1, 1], [], []>} : vector<8x32xbf16>, vector<32x32xbf16>, vector<8x32xf32> -> vector<8x32xf32>
    %c0_36 = arith.constant 0 : index
    %c0_37 = arith.constant 0 : index
    %102 = vector.load %arg5[%c0_36, %c0_37] : memref<1x32xf32, #tpu.memory_space<vmem>>, vector<1x32xf32>
    %103 = vector.broadcast %102 : vector<1x32xf32> to vector<8x32xf32>
    %104 = arith.addf %101, %103 : vector<8x32xf32>
    %c0_38 = arith.constant 0 : index
    %c0_39 = arith.constant 0 : index
    %c0_40 = arith.constant 0 : index
    %105 = vector.load %arg6[%c0_38, %c0_39, %c0_40] : memref<1x8x32xf32, #tpu.memory_space<vmem>>, vector<1x8x32xf32>
    %106 = vector.shape_cast %105 : vector<1x8x32xf32> to vector<8x32xf32>
    %107 = vector.shape_cast %104 : vector<8x32xf32> to vector<1x8x32xf32>
    tpu.vector_store %arg6[%c0_38, %c0_39, %c0_40], %107 {strides = array<i32>} : memref<1x8x32xf32, #tpu.memory_space<vmem>>, vector<1x8x32xf32>,
    return
  }
  func.func @transform_0(%arg0: i32) -> (i32, i32, i32) {
    %c0_i32 = arith.constant 0 : i32
    %c0_i32_0 = arith.constant 0 : i32
    %c0_i32_1 = arith.constant 0 : i32
    return %arg0, %c0_i32, %c0_i32_0 : i32, i32, i32
  }
  func.func @transform_1(%arg0: i32) -> (i32, i32) {
    %c0_i32 = arith.constant 0 : i32
    %c0_i32_0 = arith.constant 0 : i32
    %c0_i32_1 = arith.constant 0 : i32
    return %c0_i32, %c0_i32_0 : i32, i32
  }
  func.func @transform_2(%arg0: i32) -> (i32, i32) {
    %c0_i32 = arith.constant 0 : i32
    %c0_i32_0 = arith.constant 0 : i32
    %c0_i32_1 = arith.constant 0 : i32
    return %c0_i32, %c0_i32_0 : i32, i32
  }
  func.func @transform_3(%arg0: i32) -> (i32, i32) {
    %c0_i32 = arith.constant 0 : i32
    %c0_i32_0 = arith.constant 0 : i32
    %c0_i32_1 = arith.constant 0 : i32
    return %c0_i32, %c0_i32_0 : i32, i32
  }
  func.func @transform_4(%arg0: i32) -> (i32, i32) {
    %c0_i32 = arith.constant 0 : i32
    %c0_i32_0 = arith.constant 0 : i32
    %c0_i32_1 = arith.constant 0 : i32
    return %c0_i32, %c0_i32_0 : i32, i32
  }
  func.func @transform_5(%arg0: i32) -> (i32, i32, i32) {
    %c0_i32 = arith.constant 0 : i32
    %c0_i32_0 = arith.constant 0 : i32
    %c0_i32_1 = arith.constant 0 : i32
    return %arg0, %c0_i32, %c0_i32_0 : i32, i32, i32
  }
}

</mosaic_0001>

<llo_original>
// kernel: tpu_custom_call.1
$region0: #{tpu_custom_call.1}
  #allocation0 [shape = 'u32[]', space=smem, size = 0x4, offset = 0x4, fixed_abs, tag = 'smem constant byte address 0x4 - core index']
  #allocation1 [shape = 'u32[144,128]{1,0:T(1,128)}', space=vmem, size = 0x12000, scoped, tag = 'internal scratch']
  #allocation2 [shape = 'f32[8,32]{1,0:T(8,128)}', space=vmem, size = 0x1000, scoped, tag = 'scratch operand']
  %s0 = inlined_call_operand.hbm [shape: bf16[2,8,32], index: 0, kind: input, shape index: {}]
  %s1 = inlined_call_operand.hbm [shape: bf16[32,96], index: 1, kind: input, shape index: {}]
  %s2 = inlined_call_operand.vmem [shape: f32[1,96], index: 2, kind: input, shape index: {}]
  %s3 = inlined_call_operand.hbm [shape: bf16[32,32], index: 3, kind: input, shape index: {}]
  %s4 = inlined_call_operand.vmem [shape: f32[1,32], index: 4, kind: input, shape index: {}]
  %s5 = inlined_call_operand.hbm [shape: f32[2,8,32], index: 5, kind: output, shape index: {}]
  %s6 = sld [smem:[#allocation0]]
  $region65: #{tpu_custom_call.1} parent=0
    _
  %s8 = ssub.s32 1, %s6
  %s9 = scalar_select 0, %s8, %s6
  $region1: #{tpu_custom_call.1} parent=0
    #allocation3 [shape = 'u8[4096]{0}', space=vmem, size = 0x1000, scoped, tag = 'input window, operand 0']
    #allocation4 [shape = 's32[2]{0}', space=sflag, size = 0x8, scoped, tag = 'scoped memory for tpu_custom_call.1']
    #allocation5 [shape = 's32[2]{0}', space=sflag, size = 0x8, scoped, tag = 'scoped memory for tpu_custom_call.1']
    #allocation6 [shape = 'u8[8192]{0}', space=vmem, size = 0x2000, scoped, tag = 'input window, operand 1, single buffered']
    #allocation7 [shape = 's32[1]{0}', space=sflag, size = 0x4, scoped, tag = 'scoped memory for tpu_custom_call.1']
    #allocation8 [shape = 'u8[8192]{0}', space=vmem, size = 0x2000, scoped, tag = 'input window, operand 3, single buffered']
    #allocation9 [shape = 'u8[8192]{0}', space=vmem, size = 0x2000, scoped, tag = 'output window, operand 0']
    %10 = vsyncpa [#allocation4], 0
    %s11 = scalar_lea.sflag [#allocation4], 1
    %12 = vsyncpa %s11, 0
    %13 = vsyncpa [#allocation7], 0
    %14 = vsyncpa [#allocation5], 0
    %s15 = scalar_lea.sflag [#allocation5], 1
    %16 = vsyncpa %s15, 0
    loop: start=0, step=1, limit=4
    $region2: #{tpu_custom_call.1} parent=1 // loop_pre_header
      _
    $region3: #{tpu_custom_call.1} parent=1 // loop_header
      %s18 = sphi 0, %s22
      %p19 = scmp.ge.s32.totalorder %s18, 4
      %s28 = sphi 0, %s30
      %s31 = sphi 0, %s28
      %s32 = sphi 0, %s31
      %s48 = sphi 0, %s32
      %s52 = sphi 0, %s52
      %s54 = sphi 0, %s52
      %s55 = sphi 0, %s54
      %s69 = sphi 0, %s55
      %s73 = sphi 0, %s73
      %s75 = sphi 0, %s73
      %s76 = sphi 0, %s75
      %s90 = sphi 0, %s76
      %s94 = sphi 0, %s94
      %s96 = sphi 0, %s94
      %s97 = sphi 0, %s96
      %s111 = sphi 0, %s97
      %s115 = sphi 0, %s115
      %s117 = sphi 0, %s115
      %s118 = sphi 0, %s117
      %s132 = sphi 0, %s118
      %s138 = sphi 0, %s140
      %s141 = sphi 0, %s138
      %s142 = sphi 0, %s141
      %s158 = sphi 0, %s142
    $region4: #{tpu_custom_call.1} parent=1 // loop_header_branch
      %21 = sbr.rel (%p19) target = $region8
    $region5: #{tpu_custom_call.1} parent=1 // loop_body
      %s23 = ssub.s32 %s18, 1
      %s24 = ssub.s32 %s18, 2
      %s25 = sadd.s32 %s18, 1
      %s26 = ssub.s32 %s18, %s25
      %p27 = scmp.eq.s32.totalorder %s26, 0
      %s29 = sadd.s32 %s28, 1
      %s30 = scalar_select %p27, %s28, %s29
      %p33 = pneg %p27
      %p34 = scmp.eq.s32.totalorder %s18, 1
      %p35 = por %p33, %p34
      %p36 = scmp.ne.s32.totalorder %s28, %s31
      %p37 = scmp.eq.s32.totalorder %s18, 0
      %p38 = por %p36, %p37
      %p39 = scmp.ne.s32.totalorder %s28, %s31
      %p40 = scmp.eq.s32.totalorder %s23, 1
      %p41 = por %p39, %p40
      %p42 = scmp.ne.s32.totalorder %s31, %s32
      %p43 = scmp.eq.s32.totalorder %s23, 0
      %p44 = por %p42, %p43
      %p45 = scmp.ne.s32.totalorder %s31, %s32
      %p46 = scmp.eq.s32.totalorder %s24, 1
      %p47 = por %p45, %p46
      %p49 = scmp.ne.s32.totalorder %s32, %s48
      %p50 = scmp.eq.s32.totalorder %s24, 0
      %p51 = por %p49, %p50
      %s53 = sadd.s32 %s52, 1
      %p56 = scmp.eq.s32.totalorder %s18, 1
      %p57 = scmp.ne.s32.totalorder %s52, %s54
      %p58 = scmp.eq.s32.totalorder %s18, 0
      %p59 = por %p57, %p58
      %p60 = scmp.ne.s32.totalorder %s52, %s54
      %p61 = scmp.eq.s32.totalorder %s23, 1
      %p62 = por %p60, %p61
      %p63 = scmp.ne.s32.totalorder %s54, %s55
      %p64 = scmp.eq.s32.totalorder %s23, 0
      %p65 = por %p63, %p64
      %p66 = scmp.ne.s32.totalorder %s54, %s55
      %p67 = scmp.eq.s32.totalorder %s24, 1
      %p68 = por %p66, %p67
      %p70 = scmp.ne.s32.totalorder %s55, %s69
      %p71 = scmp.eq.s32.totalorder %s24, 0
      %p72 = por %p70, %p71
      %s74 = sadd.s32 %s73, 1
      %p77 = scmp.eq.s32.totalorder %s18, 1
      %p78 = scmp.ne.s32.totalorder %s73, %s75
      %p79 = scmp.eq.s32.totalorder %s18, 0
      %p80 = por %p78, %p79
      %p81 = scmp.ne.s32.totalorder %s73, %s75
      %p82 = scmp.eq.s32.totalorder %s23, 1
      %p83 = por %p81, %p82
      %p84 = scmp.ne.s32.totalorder %s75, %s76
      %p85 = scmp.eq.s32.totalorder %s23, 0
      %p86 = por %p84, %p85
      %p87 = scmp.ne.s32.totalorder %s75, %s76
      %p88 = scmp.eq.s32.totalorder %s24, 1
      %p89 = por %p87, %p88
      %p91 = scmp.ne.s32.totalorder %s76, %s90
      %p92 = scmp.eq.s32.totalorder %s24, 0
      %p93 = por %p91, %p92
      %s95 = sadd.s32 %s94, 1
      %p98 = scmp.eq.s32.totalorder %s18, 1
      %p99 = scmp.ne.s32.totalorder %s94, %s96
      %p100 = scmp.eq.s32.totalorder %s18, 0
      %p101 = por %p99, %p100
      %p102 = scmp.ne.s32.totalorder %s94, %s96
      %p103 = scmp.eq.s32.totalorder %s23, 1
      %p104 = por %p102, %p103
      %p105 = scmp.ne.s32.totalorder %s96, %s97
      %p106 = scmp.eq.s32.totalorder %s23, 0
      %p107 = por %p105, %p106
      %p108 = scmp.ne.s32.totalorder %s96, %s97
      %p109 = scmp.eq.s32.totalorder %s24, 1
      %p110 = por %p108, %p109
      %p112 = scmp.ne.s32.totalorder %s97, %s111
      %p113 = scmp.eq.s32.totalorder %s24, 0
      %p114 = por %p112, %p113
      %s116 = sadd.s32 %s115, 1
      %p119 = scmp.eq.s32.totalorder %s18, 1
      %p120 = scmp.ne.s32.totalorder %s115, %s117
      %p121 = scmp.eq.s32.totalorder %s18, 0
      %p122 = por %p120, %p121
      %p123 = scmp.ne.s32.totalorder %s115, %s117
      %p124 = scmp.eq.s32.totalorder %s23, 1
      %p125 = por %p123, %p124
      %p126 = scmp.ne.s32.totalorder %s117, %s118
      %p127 = scmp.eq.s32.totalorder %s23, 0
      %p128 = por %p126, %p127
      %p129 = scmp.ne.s32.totalorder %s117, %s118
      %p130 = scmp.eq.s32.totalorder %s24, 1
      %p131 = por %p129, %p130
      %p133 = scmp.ne.s32.totalorder %s118, %s132
      %p134 = scmp.eq.s32.totalorder %s24, 0
      %p135 = por %p133, %p134
      %s136 = ssub.s32 %s18, %s25
      %p137 = scmp.eq.s32.totalorder %s136, 0
      %s139 = sadd.s32 %s138, 1
      %s140 = scalar_select %p137, %s138, %s139
      %p143 = pneg %p137
      %p144 = scmp.eq.s32.totalorder %s18, 1
      %p145 = por %p143, %p144
      %p146 = scmp.ne.s32.totalorder %s138, %s141
      %p147 = scmp.eq.s32.totalorder %s18, 0
      %p148 = por %p146, %p147
      %p149 = scmp.ne.s32.totalorder %s138, %s141
      %p150 = scmp.eq.s32.totalorder %s23, 1
      %p151 = por %p149, %p150
      %p152 = scmp.ne.s32.totalorder %s141, %s142
      %p153 = scmp.eq.s32.totalorder %s23, 0
      %p154 = por %p152, %p153
      %p155 = scmp.ne.s32.totalorder %s141, %s142
      %p156 = scmp.eq.s32.totalorder %s24, 1
      %p157 = por %p155, %p156
      %p159 = scmp.ne.s32.totalorder %s142, %s158
      %p160 = scmp.eq.s32.totalorder %s24, 0
      %p161 = por %p159, %p160
      %p162 = scmp.le.s32.totalorder 1, %s18
      %p163 = scmp.lt.s32.totalorder %s18, 3
      %p164 = pnand %p162, %p163
      %p165 = pneg %p164
      // Predicated region
      $region9: #{tpu_custom_call.1} parent=5 // pred_check
        _
      $region10: #{tpu_custom_call.1} parent=5 // pred_check_branch
        %167 = sbr.rel (%p164) target = $region12
      $region11: #{tpu_custom_call.1} parent=5 // pred_region
        %s168 = ssub.s32 %s18, 1
        // Predicated region
        $region13: #{tpu_custom_call.1} parent=11 // pred_check
          %p169 = pneg %p65
        $region14: #{tpu_custom_call.1} parent=11 // pred_check_branch
          %171 = sbr.rel (%p169) target = $region16
        $region15: #{tpu_custom_call.1} parent=11 // pred_region
          %s173 = ssub.s32 256, 256
          %174 = vsyncadd [#allocation7], %s173
          %s175 = sshll.u32 [#allocation6], 4
          %s176 = int_to_ptr.vmem [resolvable:$true] %s175
          %181 = dma.hbm_to_vmem [thread:$0]  %s1, 256, %s176, [#allocation7], 64, 64, 4
        $region16: #{tpu_custom_call.1} parent=11 // pred_fallthru
          _
        // Predicated region
        $region17: #{tpu_custom_call.1} parent=11 // pred_check
          %p182 = pneg %p86
        $region18: #{tpu_custom_call.1} parent=11 // pred_check_branch
          %184 = sbr.rel (%p182) target = $region20
        $region19: #{tpu_custom_call.1} parent=11 // pred_region
          _
        $region20: #{tpu_custom_call.1} parent=11 // pred_fallthru
          _
        // Predicated region
        $region21: #{tpu_custom_call.1} parent=11 // pred_check
          %p185 = pneg %p107
        $region22: #{tpu_custom_call.1} parent=11 // pred_check_branch
          %187 = sbr.rel (%p185) target = $region24
        $region23: #{tpu_custom_call.1} parent=11 // pred_region
          %s189 = ssub.s32 256, 256
          %190 = vsyncadd [#allocation7], %s189
          %s191 = sshll.u32 [#allocation8], 4
          %s192 = int_to_ptr.vmem [resolvable:$true] %s191
          %197 = dma.hbm_to_vmem [thread:$0]  %s3, 256, %s192, [#allocation7], 64, 64, 4
        $region24: #{tpu_custom_call.1} parent=11 // pred_fallthru
          _
        // Predicated region
        $region25: #{tpu_custom_call.1} parent=11 // pred_check
          %p198 = pneg %p128
        $region26: #{tpu_custom_call.1} parent=11 // pred_check_branch
          %200 = sbr.rel (%p198) target = $region28
        $region27: #{tpu_custom_call.1} parent=11 // pred_region
          _
        $region28: #{tpu_custom_call.1} parent=11 // pred_fallthru
          _
      $region12: #{tpu_custom_call.1} parent=5 // pred_fallthru
        _
      %p201 = scmp.lt.s32.totalorder %s18, 2
      // Predicated region
      $region29: #{tpu_custom_call.1} parent=5 // pred_check
        %p202 = pneg %p201
      $region30: #{tpu_custom_call.1} parent=5 // pred_check_branch
        %204 = sbr.rel (%p202) target = $region32
      $region31: #{tpu_custom_call.1} parent=5 // pred_region
        // Predicated region
        $region33: #{tpu_custom_call.1} parent=31 // pred_check
          %p205 = pneg %p38
        $region34: #{tpu_custom_call.1} parent=31 // pred_check_branch
          %207 = sbr.rel (%p205) target = $region36
        $region35: #{tpu_custom_call.1} parent=31 // pred_region
          %s208 = sand.u32 %s28, 1
          %s209 = scalar_lea.sflag [#allocation4], %s208
          %s210 = sand.u32 %s28, 1
          %s211 = smul.addr %s210, 4
          %s212 = scalar_lea.vmem [#allocation3], %s211
          %s214 = ssub.s32 64, 64
          %215 = vsyncadd %s209, %s214
          %s216 = smul.addr %s18, 64
          %s217 = scalar_lea.hbm %s0, %s216
          %s219 = sshll.u32 %s212, 4
          %s220 = int_to_ptr.vmem [resolvable:$true] %s219
          %222 = dma.hbm_to_vmem [thread:$0]  %s217, 64, %s220, %s209
        $region36: #{tpu_custom_call.1} parent=31 // pred_fallthru
          _
      $region32: #{tpu_custom_call.1} parent=5 // pred_fallthru
        _
      %p223 = scmp.le.s32.totalorder 1, %s18
      %p224 = scmp.lt.s32.totalorder %s18, 3
      %p225 = pnand %p223, %p224
      %p226 = pneg %p225
      // Predicated region
      $region37: #{tpu_custom_call.1} parent=5 // pred_check
        _
      $region38: #{tpu_custom_call.1} parent=5 // pred_check_branch
        %228 = sbr.rel (%p225) target = $region40
      $region39: #{tpu_custom_call.1} parent=5 // pred_region
        %s229 = ssub.s32 %s18, 1
        %s230 = sand.u32 %s31, 1
        %s231 = scalar_lea.sflag [#allocation4], %s230
        %s232 = sand.u32 %s31, 1
        %s233 = smul.addr %s232, 4
        %s234 = scalar_lea.vmem [#allocation3], %s233
        // Predicated region
        $region41: #{tpu_custom_call.1} parent=39 // pred_check
          %p235 = pneg %p44
        $region42: #{tpu_custom_call.1} parent=39 // pred_check_branch
          %237 = sbr.rel (%p235) target = $region44
        $region43: #{tpu_custom_call.1} parent=39 // pred_region
          %238 = dma.done %s231, 64
        $region44: #{tpu_custom_call.1} parent=39 // pred_fallthru
          _
        // Predicated region
        $region45: #{tpu_custom_call.1} parent=39 // pred_check
          %p239 = pneg %p65
        $region46: #{tpu_custom_call.1} parent=39 // pred_check_branch
          %241 = sbr.rel (%p239) target = $region48
        $region47: #{tpu_custom_call.1} parent=39 // pred_region
          %242 = dma.done [#allocation7], 256
        $region48: #{tpu_custom_call.1} parent=39 // pred_fallthru
          _
        // Predicated region
        $region49: #{tpu_custom_call.1} parent=39 // pred_check
          %p243 = pneg %p107
        $region50: #{tpu_custom_call.1} parent=39 // pred_check_branch
          %245 = sbr.rel (%p243) target = $region52
        $region51: #{tpu_custom_call.1} parent=39 // pred_region
          %246 = dma.done [#allocation7], 256
        $region52: #{tpu_custom_call.1} parent=39 // pred_fallthru
          _
        %s247 = sand.u32 %s31, 1
        %s248 = scalar_lea.sflag [#allocation4], %s247
        %s249 = sand.u32 %s31, 1
        %s250 = smul.addr %s249, 4
        %s251 = scalar_lea.vmem [#allocation3], %s250
        %p252 = pneg %p44
        %p253 = pneg %p41
        %p254 = pneg %p65
        %p255 = pneg %p62
        %p256 = pneg %p86
        %p257 = pneg %p83
        %p258 = pneg %p107
        %p259 = pneg %p104
        %p260 = pneg %p128
        %p261 = pneg %p125
        %p262 = pneg %p154
        %p263 = pneg %p151
        %s264 = sand.u32 %s141, 1
        %s265 = scalar_lea.sflag [#allocation5], %s264
        %s266 = sand.u32 %s141, 1
        %s267 = smul.addr %s266, 8
        %s268 = scalar_lea.vmem [#allocation9], %s267
        %v270 = vld [vmem:[%s234] sm:$0xf]
        %v271 = vld [vmem:[#allocation6] sm:$0xf]
        %v272 = vld [vmem:[#allocation6 + $0x4] sm:$0xf]
        %v273 = vld [vmem:[#allocation6 + $0x8] sm:$0xf]
        %v274 = vld [vmem:[#allocation6 + $0xc] sm:$0xf]
        %v275 = vld [vmem:[%s2] sm:$0x1]
        %v277 = vlaneseq
        %v278 = vshrl.u32 %v277, 7
        %v279 = vsub.s32 0, %v278
        %v280 = vrot.slane %v275, %v279
        %v286 = vunpack.c.l.b16 %v271
        %v287 = vunpack.c.l.b16 %v272
        %v288 = vunpack.c.l.b16 %v273
        %v289 = vunpack.c.l.b16 %v274
        %v290 = vpack.c.b16 %v287, %v286
        %v291 = vpack.c.b16 %v289, %v288
        %vm294 = vcmask 261120
        %v296 = vsel %vm294, %v270, 0
        %298 = vmatprep.subr.bf16.mxu0 0
        %299 = vmatpush1.bf16.msra.mxu0 %v290
        %300 = vmatprep.subr.bf16.mxu0 0
        %301 = vmatpush1.bf16.msra.mxu0 %v291
        %302 = vmatprep.subr.bf16.mxu0 0
        %303 = vmatpush1.bf16.msra.mxu0 0
        %304 = vmatprep.subr.bf16.mxu0 0
        %305 = vmatpush1.bf16.msra.mxu0 0
        %306 = vmatprep.subr.bf16.mxu0 0
        %307 = vmatpush1.bf16.msra.mxu0 0
        %308 = vmatprep.subr.bf16.mxu0 0
        %309 = vmatpush1.bf16.msra.mxu0 0
        %310 = vmatprep.subr.bf16.mxu0 0
        %311 = vmatpush1.bf16.msra.mxu0 0
        %312 = vmatprep.subr.bf16.mxu0 0
        %313 = vmatpush1.bf16.msra.mxu0 0
        %314 = vmatprep.subr.bf16.mxu0 0
        %315 = vmatpush1.bf16.msra.mxu0 0
        %316 = vmatprep.subr.bf16.mxu0 0
        %317 = vmatpush1.bf16.msra.mxu0 0
        %318 = vmatprep.subr.bf16.mxu0 0
        %319 = vmatpush1.bf16.msra.mxu0 0
        %320 = vmatprep.subr.bf16.mxu0 0
        %321 = vmatpush1.bf16.msra.mxu0 0
        %322 = vmatprep.subr.bf16.mxu0 0
        %323 = vmatpush1.bf16.msra.mxu0 0
        %324 = vmatprep.subr.bf16.mxu0 0
        %325 = vmatpush1.bf16.msra.mxu0 0
        %326 = vmatprep.subr.bf16.mxu0 0
        %327 = vmatpush1.bf16.msra.mxu0 0
        %328 = vmatprep.subr.bf16.mxu0 0
        %329 = vmatpush1.bf16.msra.mxu0 0
        %330 = vmatprep.mubr.bf16.mxu0 0
        %331 = vmatmul.mubr.bf16.gmra.mrb[0].mxu0 %v296
        %v332 = vpop.f32.mrb[0].mxu0
        %v333 = vadd.f32 %v280, %v332
        %v334 = vpop.f32.mrb[0].mxu0
        %v335 = vpop.f32.mrb[0].mxu0
        %v336 = vpop.f32.mrb[0].mxu0
        %337 = vdwg.mxu0
        %v338 = vlaneseq
        %v339 = vshrl.u32 %v338, 7
        %v340 = vlaneseq
        %v341 = vand.u32 %v340, 127
        %vm342 = vcmp.le.s32.totalorder %v341, %v339
        %v343 = vpack.c.bf16 %v333, %v333
        %345 = vrot.lane.b32.xlu0 %v343, 96
        %v346 = vpop.permute.xlu0 %345
        %vm347 = vcmask 64512
        %v349 = vsel %vm347, %v343, 0
        %v352 = vsel %vm347, %v346, 0
        %354 = vmatprep.subr.bf16.mxu0 0
        %355 = vmatpush1.bf16.xpose.msra.mxu0 %v352
        %356 = vmatprep.subr.bf16.mxu0 0
        %357 = vmatpush1.bf16.xpose.msra.mxu0 0
        %358 = vmatprep.subr.bf16.mxu0 0
        %359 = vmatpush1.bf16.xpose.msra.mxu0 0
        %360 = vmatprep.subr.bf16.mxu0 0
        %361 = vmatpush1.bf16.xpose.msra.mxu0 0
        %362 = vmatprep.subr.bf16.mxu0 0
        %363 = vmatpush1.bf16.xpose.msra.mxu0 0
        %364 = vmatprep.subr.bf16.mxu0 0
        %365 = vmatpush1.bf16.xpose.msra.mxu0 0
        %366 = vmatprep.subr.bf16.mxu0 0
        %367 = vmatpush1.bf16.xpose.msra.mxu0 0
        %368 = vmatprep.subr.bf16.mxu0 0
        %369 = vmatpush1.bf16.xpose.msra.mxu0 0
        %370 = vmatprep.subr.bf16.mxu0 0
        %371 = vmatpush1.bf16.xpose.msra.mxu0 0
        %372 = vmatprep.subr.bf16.mxu0 0
        %373 = vmatpush1.bf16.xpose.msra.mxu0 0
        %374 = vmatprep.subr.bf16.mxu0 0
        %375 = vmatpush1.bf16.xpose.msra.mxu0 0
        %376 = vmatprep.subr.bf16.mxu0 0
        %377 = vmatpush1.bf16.xpose.msra.mxu0 0
        %378 = vmatprep.subr.bf16.mxu0 0
        %379 = vmatpush1.bf16.xpose.msra.mxu0 0
        %380 = vmatprep.subr.bf16.mxu0 0
        %381 = vmatpush1.bf16.xpose.msra.mxu0 0
        %382 = vmatprep.subr.bf16.mxu0 0
        %383 = vmatpush1.bf16.xpose.msra.mxu0 0
        %384 = vmatprep.subr.bf16.mxu0 0
        %385 = vmatpush1.bf16.xpose.msra.mxu0 0
        %386 = vmatprep.mubr.bf16.mxu0 0
        %387 = vmatmul.mubr.bf16.gmra.mrb[0].mxu0 %v349
        %v388 = vpop.f32.mrb[0].mxu0
        %v389 = vadd.f32 0.0, %v388
        %v390 = vpop.f32.mrb[0].mxu0
        %v391 = vpop.f32.mrb[0].mxu0
        %v392 = vpop.f32.mrb[0].mxu0
        %393 = vdwg.mxu0
        %v394 = vsel %vm342, %v389, -2.3819763e+38
        %v395 = vsel %vm347, %v394, -inf
        %396 = vmax.xlane.f32.xlu0 %v395
        %v397 = vpop.xlane.xlu0 %396
        %v398 = vsub.f32 %v394, %v397
        %v399 = vmul.f32 %v398, 1.442695
        %v400 = vpow.pop %v399
        %v401 = vsel %vm347, %v400, 0.0
        %402 = vadd.xlane.f32.xlu0 %v401
        %v403 = vpop.xlane.xlu0 %402
        %v404 = vrcp.pop %v403
        %v405 = vmul.f32 %v400, %v404
        %v406 = vpack.c.bf16 %v405, %v405
        %407 = vrot.lane.b32.xlu0 %v343, 64
        %v408 = vpop.permute.xlu0 %407
        %v410 = vsel %vm347, %v406, 0
        %vm412 = vcmask 1043456
        %v414 = vsel %vm412, %v408, 0
        %416 = vmatprep.subr.bf16.mxu0 0
        %417 = vmatpush1.bf16.msra.mxu0 %v414
        %418 = vmatprep.subr.bf16.mxu0 0
        %419 = vmatpush1.bf16.msra.mxu0 0
        %420 = vmatprep.subr.bf16.mxu0 0
        %421 = vmatpush1.bf16.msra.mxu0 0
        %422 = vmatprep.subr.bf16.mxu0 0
        %423 = vmatpush1.bf16.msra.mxu0 0
        %424 = vmatprep.subr.bf16.mxu0 0
        %425 = vmatpush1.bf16.msra.mxu0 0
        %426 = vmatprep.subr.bf16.mxu0 0
        %427 = vmatpush1.bf16.msra.mxu0 0
        %428 = vmatprep.subr.bf16.mxu0 0
        %429 = vmatpush1.bf16.msra.mxu0 0
        %430 = vmatprep.subr.bf16.mxu0 0
        %431 = vmatpush1.bf16.msra.mxu0 0
        %432 = vmatprep.subr.bf16.mxu0 0
        %433 = vmatpush1.bf16.msra.mxu0 0
        %434 = vmatprep.subr.bf16.mxu0 0
        %435 = vmatpush1.bf16.msra.mxu0 0
        %436 = vmatprep.subr.bf16.mxu0 0
        %437 = vmatpush1.bf16.msra.mxu0 0
        %438 = vmatprep.subr.bf16.mxu0 0
        %439 = vmatpush1.bf16.msra.mxu0 0
        %440 = vmatprep.subr.bf16.mxu0 0
        %441 = vmatpush1.bf16.msra.mxu0 0
        %442 = vmatprep.subr.bf16.mxu0 0
        %443 = vmatpush1.bf16.msra.mxu0 0
        %444 = vmatprep.subr.bf16.mxu0 0
        %445 = vmatpush1.bf16.msra.mxu0 0
        %446 = vmatprep.subr.bf16.mxu0 0
        %447 = vmatpush1.bf16.msra.mxu0 0
        %448 = vmatprep.mubr.bf16.mxu0 0
        %449 = vmatmul.mubr.bf16.gmra.mrb[0].mxu0 %v410
        %v450 = vpop.f32.mrb[0].mxu0
        %v451 = vadd.f32 0.0, %v450
        %v452 = vpop.f32.mrb[0].mxu0
        %v453 = vpop.f32.mrb[0].mxu0
        %v454 = vpop.f32.mrb[0].mxu0
        %455 = vdwg.mxu0
        %456 = vst.msk [vmem:[#allocation2] sm:$0xff] %vm347, %v451
        %457 = vrot.lane.b32.xlu0 %v343, 120
        %v458 = vpop.permute.xlu0 %457
        %459 = vrot.lane.b32.xlu0 %v343, 88
        %v460 = vpop.permute.xlu0 %459
        %v462 = vsel %vm347, %v458, 0
        %v465 = vsel %vm347, %v460, 0
        %467 = vmatprep.subr.bf16.mxu0 0
        %468 = vmatpush1.bf16.xpose.msra.mxu0 %v465
        %469 = vmatprep.subr.bf16.mxu0 0
        %470 = vmatpush1.bf16.xpose.msra.mxu0 0
        %471 = vmatprep.subr.bf16.mxu0 0
        %472 = vmatpush1.bf16.xpose.msra.mxu0 0
        %473 = vmatprep.subr.bf16.mxu0 0
        %474 = vmatpush1.bf16.xpose.msra.mxu0 0
        %475 = vmatprep.subr.bf16.mxu0 0
        %476 = vmatpush1.bf16.xpose.msra.mxu0 0
        %477 = vmatprep.subr.bf16.mxu0 0
        %478 = vmatpush1.bf16.xpose.msra.mxu0 0
        %479 = vmatprep.subr.bf16.mxu0 0
        %480 = vmatpush1.bf16.xpose.msra.mxu0 0
        %481 = vmatprep.subr.bf16.mxu0 0
        %482 = vmatpush1.bf16.xpose.msra.mxu0 0
        %483 = vmatprep.subr.bf16.mxu0 0
        %484 = vmatpush1.bf16.xpose.msra.mxu0 0
        %485 = vmatprep.subr.bf16.mxu0 0
        %486 = vmatpush1.bf16.xpose.msra.mxu0 0
        %487 = vmatprep.subr.bf16.mxu0 0
        %488 = vmatpush1.bf16.xpose.msra.mxu0 0
        %489 = vmatprep.subr.bf16.mxu0 0
        %490 = vmatpush1.bf16.xpose.msra.mxu0 0
        %491 = vmatprep.subr.bf16.mxu0 0
        %492 = vmatpush1.bf16.xpose.msra.mxu0 0
        %493 = vmatprep.subr.bf16.mxu0 0
        %494 = vmatpush1.bf16.xpose.msra.mxu0 0
        %495 = vmatprep.subr.bf16.mxu0 0
        %496 = vmatpush1.bf16.xpose.msra.mxu0 0
        %497 = vmatprep.subr.bf16.mxu0 0
        %498 = vmatpush1.bf16.xpose.msra.mxu0 0
        %499 = vmatprep.mubr.bf16.mxu0 0
        %500 = vmatmul.mubr.bf16.gmra.mrb[0].mxu0 %v462
        %v501 = vpop.f32.mrb[0].mxu0
        %v502 = vadd.f32 0.0, %v501
        %v503 = vpop.f32.mrb[0].mxu0
        %v504 = vpop.f32.mrb[0].mxu0
        %v505 = vpop.f32.mrb[0].mxu0
        %506 = vdwg.mxu0
        %v507 = vsel %vm342, %v502, -2.3819763e+38
        %v508 = vsel %vm347, %v507, -inf
        %509 = vmax.xlane.f32.xlu0 %v508
        %v510 = vpop.xlane.xlu0 %509
        %v511 = vsub.f32 %v507, %v510
        %v512 = vmul.f32 %v511, 1.442695
        %v513 = vpow.pop %v512
        %v514 = vsel %vm347, %v513, 0.0
        %515 = vadd.xlane.f32.xlu0 %v514
        %v516 = vpop.xlane.xlu0 %515
        %v517 = vrcp.pop %v516
        %v518 = vmul.f32 %v513, %v517
        %v519 = vpack.c.bf16 %v518, %v518
        %520 = vrot.lane.b32.xlu0 %v343, 56
        %v521 = vpop.permute.xlu0 %520
        %v523 = vsel %vm347, %v519, 0
        %v526 = vsel %vm412, %v521, 0
        %528 = vmatprep.subr.bf16.mxu0 0
        %529 = vmatpush1.bf16.msra.mxu0 %v526
        %530 = vmatprep.subr.bf16.mxu0 0
        %531 = vmatpush1.bf16.msra.mxu0 0
        %532 = vmatprep.subr.bf16.mxu0 0
        %533 = vmatpush1.bf16.msra.mxu0 0
        %534 = vmatprep.subr.bf16.mxu0 0
        %535 = vmatpush1.bf16.msra.mxu0 0
        %536 = vmatprep.subr.bf16.mxu0 0
        %537 = vmatpush1.bf16.msra.mxu0 0
        %538 = vmatprep.subr.bf16.mxu0 0
        %539 = vmatpush1.bf16.msra.mxu0 0
        %540 = vmatprep.subr.bf16.mxu0 0
        %541 = vmatpush1.bf16.msra.mxu0 0
        %542 = vmatprep.subr.bf16.mxu0 0
        %543 = vmatpush1.bf16.msra.mxu0 0
        %544 = vmatprep.subr.bf16.mxu0 0
        %545 = vmatpush1.bf16.msra.mxu0 0
        %546 = vmatprep.subr.bf16.mxu0 0
        %547 = vmatpush1.bf16.msra.mxu0 0
        %548 = vmatprep.subr.bf16.mxu0 0
        %549 = vmatpush1.bf16.msra.mxu0 0
        %550 = vmatprep.subr.bf16.mxu0 0
        %551 = vmatpush1.bf16.msra.mxu0 0
        %552 = vmatprep.subr.bf16.mxu0 0
        %553 = vmatpush1.bf16.msra.mxu0 0
        %554 = vmatprep.subr.bf16.mxu0 0
        %555 = vmatpush1.bf16.msra.mxu0 0
        %556 = vmatprep.subr.bf16.mxu0 0
        %557 = vmatpush1.bf16.msra.mxu0 0
        %558 = vmatprep.subr.bf16.mxu0 0
        %559 = vmatpush1.bf16.msra.mxu0 0
        %560 = vmatprep.mubr.bf16.mxu0 0
        %561 = vmatmul.mubr.bf16.gmra.mrb[0].mxu0 %v523
        %v562 = vpop.f32.mrb[0].mxu0
        %v563 = vadd.f32 0.0, %v562
        %v564 = vpop.f32.mrb[0].mxu0
        %v565 = vpop.f32.mrb[0].mxu0
        %v566 = vpop.f32.mrb[0].mxu0
        %567 = vdwg.mxu0
        %569 = vrot.lane.b32.xlu0 %v563, 8
        %v570 = vpop.permute.xlu0 %569
        %vm572 = vcmask 130112
        %573 = vst.msk [vmem:[#allocation2] sm:$0xff] %vm572, %v570
        %574 = vrot.lane.b32.xlu0 %v343, 112
        %v575 = vpop.permute.xlu0 %574
        %576 = vrot.lane.b32.xlu0 %v343, 80
        %v577 = vpop.permute.xlu0 %576
        %v579 = vsel %vm347, %v575, 0
        %v582 = vsel %vm347, %v577, 0
        %584 = vmatprep.subr.bf16.mxu0 0
        %585 = vmatpush1.bf16.xpose.msra.mxu0 %v582
        %586 = vmatprep.subr.bf16.mxu0 0
        %587 = vmatpush1.bf16.xpose.msra.mxu0 0
        %588 = vmatprep.subr.bf16.mxu0 0
        %589 = vmatpush1.bf16.xpose.msra.mxu0 0
        %590 = vmatprep.subr.bf16.mxu0 0
        %591 = vmatpush1.bf16.xpose.msra.mxu0 0
        %592 = vmatprep.subr.bf16.mxu0 0
        %593 = vmatpush1.bf16.xpose.msra.mxu0 0
        %594 = vmatprep.subr.bf16.mxu0 0
        %595 = vmatpush1.bf16.xpose.msra.mxu0 0
        %596 = vmatprep.subr.bf16.mxu0 0
        %597 = vmatpush1.bf16.xpose.msra.mxu0 0
        %598 = vmatprep.subr.bf16.mxu0 0
        %599 = vmatpush1.bf16.xpose.msra.mxu0 0
        %600 = vmatprep.subr.bf16.mxu0 0
        %601 = vmatpush1.bf16.xpose.msra.mxu0 0
        %602 = vmatprep.subr.bf16.mxu0 0
        %603 = vmatpush1.bf16.xpose.msra.mxu0 0
        %604 = vmatprep.subr.bf16.mxu0 0
        %605 = vmatpush1.bf16.xpose.msra.mxu0 0
        %606 = vmatprep.subr.bf16.mxu0 0
        %607 = vmatpush1.bf16.xpose.msra.mxu0 0
        %608 = vmatprep.subr.bf16.mxu0 0
        %609 = vmatpush1.bf16.xpose.msra.mxu0 0
        %610 = vmatprep.subr.bf16.mxu0 0
        %611 = vmatpush1.bf16.xpose.msra.mxu0 0
        %612 = vmatprep.subr.bf16.mxu0 0
        %613 = vmatpush1.bf16.xpose.msra.mxu0 0
        %614 = vmatprep.subr.bf16.mxu0 0
        %615 = vmatpush1.bf16.xpose.msra.mxu0 0
        %616 = vmatprep.mubr.bf16.mxu0 0
        %617 = vmatmul.mubr.bf16.gmra.mrb[0].mxu0 %v579
        %v618 = vpop.f32.mrb[0].mxu0
        %v619 = vadd.f32 0.0, %v618
        %v620 = vpop.f32.mrb[0].mxu0
        %v621 = vpop.f32.mrb[0].mxu0
        %v622 = vpop.f32.mrb[0].mxu0
        %623 = vdwg.mxu0
        %v624 = vsel %vm342, %v619, -2.3819763e+38
        %v625 = vsel %vm347, %v624, -inf
        %626 = vmax.xlane.f32.xlu0 %v625
        %v627 = vpop.xlane.xlu0 %626
        %v628 = vsub.f32 %v624, %v627
        %v629 = vmul.f32 %v628, 1.442695
        %v630 = vpow.pop %v629
        %v631 = vsel %vm347, %v630, 0.0
        %632 = vadd.xlane.f32.xlu0 %v631
        %v633 = vpop.xlane.xlu0 %632
        %v634 = vrcp.pop %v633
        %v635 = vmul.f32 %v630, %v634
        %v636 = vpack.c.bf16 %v635, %v635
        %637 = vrot.lane.b32.xlu0 %v343, 48
        %v638 = vpop.permute.xlu0 %637
        %v640 = vsel %vm347, %v636, 0
        %v643 = vsel %vm412, %v638, 0
        %645 = vmatprep.subr.bf16.mxu0 0
        %646 = vmatpush1.bf16.msra.mxu0 %v643
        %647 = vmatprep.subr.bf16.mxu0 0
        %648 = vmatpush1.bf16.msra.mxu0 0
        %649 = vmatprep.subr.bf16.mxu0 0
        %650 = vmatpush1.bf16.msra.mxu0 0
        %651 = vmatprep.subr.bf16.mxu0 0
        %652 = vmatpush1.bf16.msra.mxu0 0
        %653 = vmatprep.subr.bf16.mxu0 0
        %654 = vmatpush1.bf16.msra.mxu0 0
        %655 = vmatprep.subr.bf16.mxu0 0
        %656 = vmatpush1.bf16.msra.mxu0 0
        %657 = vmatprep.subr.bf16.mxu0 0
        %658 = vmatpush1.bf16.msra.mxu0 0
        %659 = vmatprep.subr.bf16.mxu0 0
        %660 = vmatpush1.bf16.msra.mxu0 0
        %661 = vmatprep.subr.bf16.mxu0 0
        %662 = vmatpush1.bf16.msra.mxu0 0
        %663 = vmatprep.subr.bf16.mxu0 0
        %664 = vmatpush1.bf16.msra.mxu0 0
        %665 = vmatprep.subr.bf16.mxu0 0
        %666 = vmatpush1.bf16.msra.mxu0 0
        %667 = vmatprep.subr.bf16.mxu0 0
        %668 = vmatpush1.bf16.msra.mxu0 0
        %669 = vmatprep.subr.bf16.mxu0 0
        %670 = vmatpush1.bf16.msra.mxu0 0
        %671 = vmatprep.subr.bf16.mxu0 0
        %672 = vmatpush1.bf16.msra.mxu0 0
        %673 = vmatprep.subr.bf16.mxu0 0
        %674 = vmatpush1.bf16.msra.mxu0 0
        %675 = vmatprep.subr.bf16.mxu0 0
        %676 = vmatpush1.bf16.msra.mxu0 0
        %677 = vmatprep.mubr.bf16.mxu0 0
        %678 = vmatmul.mubr.bf16.gmra.mrb[0].mxu0 %v640
        %v679 = vpop.f32.mrb[0].mxu0
        %v680 = vadd.f32 0.0, %v679
        %v681 = vpop.f32.mrb[0].mxu0
        %v682 = vpop.f32.mrb[0].mxu0
        %v683 = vpop.f32.mrb[0].mxu0
        %684 = vdwg.mxu0
        %686 = vrot.lane.b32.xlu0 %v680, 16
        %v687 = vpop.permute.xlu0 %686
        %vm689 = vcmask 195712
        %690 = vst.msk [vmem:[#allocation2] sm:$0xff] %vm689, %v687
        %691 = vrot.lane.b32.xlu0 %v343, 104
        %v692 = vpop.permute.xlu0 %691
        %693 = vrot.lane.b32.xlu0 %v343, 72
        %v694 = vpop.permute.xlu0 %693
        %v696 = vsel %vm347, %v692, 0
        %v699 = vsel %vm347, %v694, 0
        %701 = vmatprep.subr.bf16.mxu0 0
        %702 = vmatpush1.bf16.xpose.msra.mxu0 %v699
        %703 = vmatprep.subr.bf16.mxu0 0
        %704 = vmatpush1.bf16.xpose.msra.mxu0 0
        %705 = vmatprep.subr.bf16.mxu0 0
        %706 = vmatpush1.bf16.xpose.msra.mxu0 0
        %707 = vmatprep.subr.bf16.mxu0 0
        %708 = vmatpush1.bf16.xpose.msra.mxu0 0
        %709 = vmatprep.subr.bf16.mxu0 0
        %710 = vmatpush1.bf16.xpose.msra.mxu0 0
        %711 = vmatprep.subr.bf16.mxu0 0
        %712 = vmatpush1.bf16.xpose.msra.mxu0 0
        %713 = vmatprep.subr.bf16.mxu0 0
        %714 = vmatpush1.bf16.xpose.msra.mxu0 0
        %715 = vmatprep.subr.bf16.mxu0 0
        %716 = vmatpush1.bf16.xpose.msra.mxu0 0
        %717 = vmatprep.subr.bf16.mxu0 0
        %718 = vmatpush1.bf16.xpose.msra.mxu0 0
        %719 = vmatprep.subr.bf16.mxu0 0
        %720 = vmatpush1.bf16.xpose.msra.mxu0 0
        %721 = vmatprep.subr.bf16.mxu0 0
        %722 = vmatpush1.bf16.xpose.msra.mxu0 0
        %723 = vmatprep.subr.bf16.mxu0 0
        %724 = vmatpush1.bf16.xpose.msra.mxu0 0
        %725 = vmatprep.subr.bf16.mxu0 0
        %726 = vmatpush1.bf16.xpose.msra.mxu0 0
        %727 = vmatprep.subr.bf16.mxu0 0
        %728 = vmatpush1.bf16.xpose.msra.mxu0 0
        %729 = vmatprep.subr.bf16.mxu0 0
        %730 = vmatpush1.bf16.xpose.msra.mxu0 0
        %731 = vmatprep.subr.bf16.mxu0 0
        %732 = vmatpush1.bf16.xpose.msra.mxu0 0
        %733 = vmatprep.mubr.bf16.mxu0 0
        %734 = vmatmul.mubr.bf16.gmra.mrb[0].mxu0 %v696
        %v735 = vpop.f32.mrb[0].mxu0
        %v736 = vadd.f32 0.0, %v735
        %v737 = vpop.f32.mrb[0].mxu0
        %v738 = vpop.f32.mrb[0].mxu0
        %v739 = vpop.f32.mrb[0].mxu0
        %740 = vdwg.mxu0
        %v741 = vsel %vm342, %v736, -2.3819763e+38
        %v742 = vsel %vm347, %v741, -inf
        %743 = vmax.xlane.f32.xlu0 %v742
        %v744 = vpop.xlane.xlu0 %743
        %v745 = vsub.f32 %v741, %v744
        %v746 = vmul.f32 %v745, 1.442695
        %v747 = vpow.pop %v746
        %v748 = vsel %vm347, %v747, 0.0
        %749 = vadd.xlane.f32.xlu0 %v748
        %v750 = vpop.xlane.xlu0 %749
        %v751 = vrcp.pop %v750
        %v752 = vmul.f32 %v747, %v751
        %v753 = vpack.c.bf16 %v752, %v752
        %754 = vrot.lane.b32.xlu0 %v343, 40
        %v755 = vpop.permute.xlu0 %754
        %v757 = vsel %vm347, %v753, 0
        %v760 = vsel %vm412, %v755, 0
        %762 = vmatprep.subr.bf16.mxu0 0
        %763 = vmatpush1.bf16.msra.mxu0 %v760
        %764 = vmatprep.subr.bf16.mxu0 0
        %765 = vmatpush1.bf16.msra.mxu0 0
        %766 = vmatprep.subr.bf16.mxu0 0
        %767 = vmatpush1.bf16.msra.mxu0 0
        %768 = vmatprep.subr.bf16.mxu0 0
        %769 = vmatpush1.bf16.msra.mxu0 0
        %770 = vmatprep.subr.bf16.mxu0 0
        %771 = vmatpush1.bf16.msra.mxu0 0
        %772 = vmatprep.subr.bf16.mxu0 0
        %773 = vmatpush1.bf16.msra.mxu0 0
        %774 = vmatprep.subr.bf16.mxu0 0
        %775 = vmatpush1.bf16.msra.mxu0 0
        %776 = vmatprep.subr.bf16.mxu0 0
        %777 = vmatpush1.bf16.msra.mxu0 0
        %778 = vmatprep.subr.bf16.mxu0 0
        %779 = vmatpush1.bf16.msra.mxu0 0
        %780 = vmatprep.subr.bf16.mxu0 0
        %781 = vmatpush1.bf16.msra.mxu0 0
        %782 = vmatprep.subr.bf16.mxu0 0
        %783 = vmatpush1.bf16.msra.mxu0 0
        %784 = vmatprep.subr.bf16.mxu0 0
        %785 = vmatpush1.bf16.msra.mxu0 0
        %786 = vmatprep.subr.bf16.mxu0 0
        %787 = vmatpush1.bf16.msra.mxu0 0
        %788 = vmatprep.subr.bf16.mxu0 0
        %789 = vmatpush1.bf16.msra.mxu0 0
        %790 = vmatprep.subr.bf16.mxu0 0
        %791 = vmatpush1.bf16.msra.mxu0 0
        %792 = vmatprep.subr.bf16.mxu0 0
        %793 = vmatpush1.bf16.msra.mxu0 0
        %794 = vmatprep.mubr.bf16.mxu0 0
        %795 = vmatmul.mubr.bf16.gmra.mrb[0].mxu0 %v757
        %v796 = vpop.f32.mrb[0].mxu0
        %v797 = vadd.f32 0.0, %v796
        %v798 = vpop.f32.mrb[0].mxu0
        %v799 = vpop.f32.mrb[0].mxu0
        %v800 = vpop.f32.mrb[0].mxu0
        %801 = vdwg.mxu0
        %803 = vrot.lane.b32.xlu0 %v797, 24
        %v804 = vpop.permute.xlu0 %803
        %vm806 = vcmask 261312
        %807 = vst.msk [vmem:[#allocation2] sm:$0xff] %vm806, %v804
        %v808 = vld [vmem:[#allocation2] sm:$0xff]
        %v809 = vpack.c.bf16 %v808, %v808
        %v810 = vld [vmem:[#allocation8] sm:$0xf]
        %v811 = vld [vmem:[#allocation8 + $0x4] sm:$0xf]
        %v812 = vld [vmem:[#allocation8 + $0x8] sm:$0xf]
        %v813 = vld [vmem:[#allocation8 + $0xc] sm:$0xf]
        %v814 = vld [vmem:[%s4] sm:$0x1]
        %v816 = vlaneseq
        %v817 = vshrl.u32 %v816, 7
        %v818 = vsub.s32 0, %v817
        %v819 = vrot.slane %v814, %v818
        %v825 = vunpack.c.l.b16 %v810
        %v826 = vunpack.c.l.b16 %v811
        %v827 = vunpack.c.l.b16 %v812
        %v828 = vunpack.c.l.b16 %v813
        %v829 = vpack.c.b16 %v826, %v825
        %v830 = vpack.c.b16 %v828, %v827
        %v834 = vsel %vm294, %v809, 0
        %836 = vmatprep.subr.bf16.mxu0 0
        %837 = vmatpush1.bf16.msra.mxu0 %v829
        %838 = vmatprep.subr.bf16.mxu0 0
        %839 = vmatpush1.bf16.msra.mxu0 %v830
        %840 = vmatprep.subr.bf16.mxu0 0
        %841 = vmatpush1.bf16.msra.mxu0 0
        %842 = vmatprep.subr.bf16.mxu0 0
        %843 = vmatpush1.bf16.msra.mxu0 0
        %844 = vmatprep.subr.bf16.mxu0 0
        %845 = vmatpush1.bf16.msra.mxu0 0
        %846 = vmatprep.subr.bf16.mxu0 0
        %847 = vmatpush1.bf16.msra.mxu0 0
        %848 = vmatprep.subr.bf16.mxu0 0
        %849 = vmatpush1.bf16.msra.mxu0 0
        %850 = vmatprep.subr.bf16.mxu0 0
        %851 = vmatpush1.bf16.msra.mxu0 0
        %852 = vmatprep.subr.bf16.mxu0 0
        %853 = vmatpush1.bf16.msra.mxu0 0
        %854 = vmatprep.subr.bf16.mxu0 0
        %855 = vmatpush1.bf16.msra.mxu0 0
        %856 = vmatprep.subr.bf16.mxu0 0
        %857 = vmatpush1.bf16.msra.mxu0 0
        %858 = vmatprep.subr.bf16.mxu0 0
        %859 = vmatpush1.bf16.msra.mxu0 0
        %860 = vmatprep.subr.bf16.mxu0 0
        %861 = vmatpush1.bf16.msra.mxu0 0
        %862 = vmatprep.subr.bf16.mxu0 0
        %863 = vmatpush1.bf16.msra.mxu0 0
        %864 = vmatprep.subr.bf16.mxu0 0
        %865 = vmatpush1.bf16.msra.mxu0 0
        %866 = vmatprep.subr.bf16.mxu0 0
        %867 = vmatpush1.bf16.msra.mxu0 0
        %868 = vmatprep.mubr.bf16.mxu0 0
        %869 = vmatmul.mubr.bf16.gmra.mrb[0].mxu0 %v834
        %v870 = vpop.f32.mrb[0].mxu0
        %v871 = vadd.f32 %v819, %v870
        %v872 = vpop.f32.mrb[0].mxu0
        %v873 = vpop.f32.mrb[0].mxu0
        %v874 = vpop.f32.mrb[0].mxu0
        %875 = vdwg.mxu0
        %876 = vst.msk [vmem:[%s268] sm:$0xff] %vm294, %v871
        %s877 = sand.u32 %s141, 1
        %s878 = scalar_lea.sflag [#allocation5], %s877
        %s879 = sand.u32 %s141, 1
        %s880 = smul.addr %s879, 8
        %s881 = scalar_lea.vmem [#allocation9], %s880
        // Predicated region
        $region53: #{tpu_custom_call.1} parent=39 // pred_check
          %p882 = pneg %p151
        $region54: #{tpu_custom_call.1} parent=39 // pred_check_branch
          %884 = sbr.rel (%p882) target = $region56
        $region55: #{tpu_custom_call.1} parent=39 // pred_region
          %s886 = ssub.s32 128, 128
          %887 = vsyncadd %s878, %s886
          %s888 = smul.addr %s23, 128
          %s889 = scalar_lea.hbm %s5, %s888
          %s891 = sshll.u32 %s881, 4
          %s892 = int_to_ptr.vmem [resolvable:$true] %s891
          %894 = dma.vmem_to_hbm [thread:$0]  %s892, 128, %s889, %s878
        $region56: #{tpu_custom_call.1} parent=39 // pred_fallthru
          _
      $region40: #{tpu_custom_call.1} parent=5 // pred_fallthru
        _
      %p895 = scmp.le.s32.totalorder 2, %s18
      // Predicated region
      $region57: #{tpu_custom_call.1} parent=5 // pred_check
        %p896 = pneg %p895
      $region58: #{tpu_custom_call.1} parent=5 // pred_check_branch
        %898 = sbr.rel (%p896) target = $region60
      $region59: #{tpu_custom_call.1} parent=5 // pred_region
        %s899 = ssub.s32 %s18, 2
        // Predicated region
        $region61: #{tpu_custom_call.1} parent=59 // pred_check
          %p900 = pneg %p157
        $region62: #{tpu_custom_call.1} parent=59 // pred_check_branch
          %902 = sbr.rel (%p900) target = $region64
        $region63: #{tpu_custom_call.1} parent=59 // pred_region
          %s903 = sand.u32 %s142, 1
          %s904 = scalar_lea.sflag [#allocation5], %s903
          %s905 = sand.u32 %s142, 1
          %s906 = smul.addr %s905, 8
          %s907 = scalar_lea.vmem [#allocation9], %s906
          %908 = dma.done %s904, 128
        $region64: #{tpu_custom_call.1} parent=59 // pred_fallthru
          _
      $region60: #{tpu_custom_call.1} parent=5 // pred_fallthru
        _
    $region6: #{tpu_custom_call.1} parent=1 // loop_footer
      %s22 = sadd.s32 1, %s18
    $region7: #{tpu_custom_call.1} parent=1 // loop_footer_branch
      %17 = sbr.rel target = $region3
    $region8: #{tpu_custom_call.1} parent=1 // loop_exit
      _
    %909 = vsyncpa [#allocation4], 1
    %s910 = scalar_lea.sflag [#allocation4], 1
    %911 = vsyncpa %s910, 1
    %912 = vsyncpa [#allocation7], 1
    %913 = vsyncpa [#allocation5], 1
    %s914 = scalar_lea.sflag [#allocation5], 1
    %915 = vsyncpa %s914, 1

</llo_original>
